<compile_context>
chip_gen: v7x
topology: tpu7x:2x2x1
jax: 0.10.0
libtpu: 0.0.40
codegen_flags: <defaults>
</compile_context>

<pallas_src>
import functools

import jax
import jax.numpy as jnp
from jax.experimental import pallas as pl
from jax.experimental.pallas import tpu as pltpu

F_PAD = 8          # 3 input features + 1 constant-one row (bias fold), padded to a sublane group
_NEG_BIG = -1e30   # bias for padded softmax rows -> exp underflows to exactly 0


def _cdiv(a, b):
    return (a + b - 1) // b


def _round_up(a, m):
    return _cdiv(a, m) * m


def mdn_kernel(xT_ref, w1_ref, w2_ref, b2_ref, wh_ref, bh_ref, out_ref, *,
               n_pi, act_dtype):
    """All tensors are (features, batch_tile): the batch lives on the lane axis."""
    xT = xT_ref[...]                                                   # (F_PAD, T)

    # Layer 1: b1 is folded into w1 and applied via the constant-1 row of x^T.
    a1 = jnp.dot(w1_ref[...], xT, preferred_element_type=jnp.float32)  # (H, T)
    h1 = jnp.tanh(a1.astype(act_dtype)).astype(jnp.float32)

    a2 = jnp.dot(w2_ref[...], h1, preferred_element_type=jnp.float32) + b2_ref[...]
    h2 = jnp.tanh(a2.astype(act_dtype)).astype(jnp.float32)            # (H, T)

    # Fused heads: one (3B, H) @ (H, T) matmul for pi / alpha / beta logits.
    z = jnp.dot(wh_ref[...], h2, preferred_element_type=jnp.float32) + bh_ref[...]

    # pi: numerically stable softmax over the mixture (sublane) axis.
    pi_logits = z[:n_pi]                                               # (B_pad, T)
    pi_max = jnp.max(pi_logits, axis=0, keepdims=True)
    pi_exp = jnp.exp(pi_logits - pi_max)
    # Exact reciprocal: one (1, T) divide, keeps sum(pi) == 1 to float rounding.
    inv_den = pl.reciprocal(jnp.sum(pi_exp, axis=0, keepdims=True), approx=False)
    out_ref[:n_pi, :] = pi_exp * inv_den

    # alpha / beta: exp of the remaining 2B rows, stored lane-dense in one shot.
    out_ref[n_pi:, :] = jnp.exp(z[n_pi:])


def pack_mdn_params(params):
    """One-time packing of PyTorch-layout params into kernel-ready arrays.

    * b1 is folded into w1 (applied via the constant-1 input row).
    * The three heads are fused into a single (3*B_pad, H) weight / (3*B_pad, 1)
      bias, B_pad = round_up(n_beta, 8).  Padded pi rows get a -1e30 bias so
      their softmax weight is exactly 0; padded alpha/beta rows are harmless
      and sliced off by the wrapper.
    """
    n_hidden, n_feat = params["w1"].shape
    n_beta = params["w_pi"].shape[0]
    b_pad = _round_up(n_beta, 8)

    w1 = jnp.zeros((n_hidden, F_PAD), jnp.float32)
    w1 = w1.at[:, :n_feat].set(params["w1"])
    w1 = w1.at[:, n_feat].set(params["b1"])        # bias column hit by the 1-row of x^T

    def pad_head(w, b, pad_bias):
        w_p = jnp.zeros((b_pad, n_hidden), jnp.float32).at[:n_beta].set(w)
        b_p = jnp.full((b_pad,), pad_bias, jnp.float32).at[:n_beta].set(b)
        return w_p, b_p

    w_pi, b_pi = pad_head(params["w_pi"], params["b_pi"], _NEG_BIG)
    w_al, b_al = pad_head(params["w_alpha"], params["b_alpha"], 0.0)
    w_be, b_be = pad_head(params["w_beta"], params["b_beta"], 0.0)

    return dict(
        w1=w1,
        w2=params["w2"],
        b2=params["b2"][:, None],
        w_heads=jnp.concatenate([w_pi, w_al, w_be], axis=0),          # (3*B_pad, H)
        b_heads=jnp.concatenate([b_pi, b_al, b_be], axis=0)[:, None], # (3*B_pad, 1)
    )


def _mdn_forward_impl(x, packed, *, n_beta, tile_cap=8192, act_dtype=jnp.float32):
    """x: (N, 3) f32, packed: pack_mdn_params output -> (pi, alpha, beta), each (N, n_beta)."""
    n, n_feat = x.shape
    w1, w2, b2 = packed["w1"], packed["w2"], packed["b2"]
    w_heads, b_heads = packed["w_heads"], packed["b_heads"]
    n_hidden = w1.shape[0]
    n_heads = w_heads.shape[0]              # 3 * B_pad
    b_pad = n_heads // 3

    # Tile from the grid (not the grid from the tile): padding stays < 128 rows
    # per step, and we keep >= 2 "parallel" steps when the batch is big enough
    # so both v7x TensorCores get work.
    min_grid = 2 if n >= 256 else 1
    grid = max(_cdiv(n, tile_cap), min_grid)
    tile = _round_up(_cdiv(n, grid), 128)
    n_pad = grid * tile

    # x^T with a constant-1 row (applies b1 through the layer-1 matmul), padded
    # to (F_PAD, n_pad).  allow_input_fusion lets XLA fold this layout op into
    # the Pallas input DMA instead of a separate HBM pass.
    xT = jnp.concatenate([x.T, jnp.ones((1, n), x.dtype)], axis=0)
    xT = jnp.pad(xT, ((0, F_PAD - n_feat - 1), (0, n_pad - n)))

    def const(a):
        # Full-array, grid-invariant block: stays resident in VMEM across steps.
        return pl.BlockSpec(a.shape, lambda i: (0,) * a.ndim)

    kernel = functools.partial(mdn_kernel, n_pi=b_pad, act_dtype=act_dtype)

    flops = 2 * n_pad * (F_PAD * n_hidden + n_hidden * n_hidden + n_hidden * n_heads)
    transc = n_pad * (2 * n_hidden + n_heads)
    bytes_accessed = 4 * (F_PAD * n_pad + w1.size + w2.size + w_heads.size
                          + b2.size + b_heads.size + n_heads * n_pad)

    out = pl.pallas_call(
        kernel,
        out_shape=jax.ShapeDtypeStruct((n_heads, n_pad), jnp.float32),
        grid=(grid,),
        in_specs=[
            pl.BlockSpec((F_PAD, tile), lambda i: (0, i)),   # x tile (lane-dense)
            const(w1), const(w2), const(b2), const(w_heads), const(b_heads),
        ],
        out_specs=pl.BlockSpec((n_heads, tile), lambda i: (0, i)),
        compiler_params=pltpu.CompilerParams(
            dimension_semantics=("parallel",),
            allow_input_fusion=[True, False, False, False, False, False]),
        cost_estimate=pl.CostEstimate(
            flops=flops, transcendentals=transc, bytes_accessed=bytes_accessed),
    )(xT, w1, w2, b2, w_heads, b_heads)

    # Single (3B, n_pad) -> (n_pad, 3B) transpose instead of three skinny ones;
    # per-head slices afterwards are cheap.
    outT = out.T
    pi = outT[:n, 0 * b_pad:0 * b_pad + n_beta]
    alpha = outT[:n, 1 * b_pad:1 * b_pad + n_beta]
    beta = outT[:n, 2 * b_pad:2 * b_pad + n_beta]
    return pi, alpha, beta


mdn_forward = jax.jit(_mdn_forward_impl,
                      static_argnames=("n_beta", "tile_cap", "act_dtype"))


def make_params(key, n_hidden, n_beta):
    """Deterministic synthetic parameters in PyTorch nn.Linear (out, in) layout."""
    ks = jax.random.split(key, 10)

    def lin(kw, kb, fan_in, fan_out):
        bound = 1.0 / (fan_in ** 0.5)
        w = jax.random.uniform(kw, (fan_out, fan_in), jnp.float32, -bound, bound)
        b = jax.random.uniform(kb, (fan_out,), jnp.float32, -bound, bound)
        return w, b

    w1, b1 = lin(ks[0], ks[1], 3, n_hidden)
    w2, b2 = lin(ks[2], ks[3], n_hidden, n_hidden)
    w_pi, b_pi = lin(ks[4], ks[5], n_hidden, n_beta)
    w_alpha, b_alpha = lin(ks[6], ks[7], n_hidden, n_beta)
    w_beta, b_beta = lin(ks[8], ks[9], n_hidden, n_beta)

    return dict(w1=w1, b1=b1, w2=w2, b2=b2,
                w_pi=w_pi, b_pi=b_pi,
                w_alpha=w_alpha, b_alpha=b_alpha,
                w_beta=w_beta, b_beta=b_beta)


def mdn_reference(x, p):
    """Pure-JAX reference (PyTorch layout) for verification."""
    h = jnp.tanh(x @ p["w1"].T + p["b1"])
    h = jnp.tanh(h @ p["w2"].T + p["b2"])
    pi = jax.nn.softmax(h @ p["w_pi"].T + p["b_pi"], axis=-1)
    alpha = jnp.exp(h @ p["w_alpha"].T + p["b_alpha"])
    beta = jnp.exp(h @ p["w_beta"].T + p["b_beta"])
    return pi, alpha, beta


if __name__ == "__main__":
    N, N_HIDDEN, N_BETA = 300, 32, 8   # -> grid=2, tile=256: both v7x TCs get work

    key = jax.random.PRNGKey(0)
    kx, kp = jax.random.split(key)
    x = jax.random.normal(kx, (N, 3), dtype=jnp.float32)
    params = make_params(kp, N_HIDDEN, N_BETA)
    packed = pack_mdn_params(params)   # one-time bias fold / head fusion / padding

    pi, alpha, beta = mdn_forward(x, packed, n_beta=N_BETA)
    jax.block_until_ready((pi, alpha, beta))

    pi_r, alpha_r, beta_r = mdn_reference(x, params)
    assert pi.shape == (N, N_BETA)
    assert alpha.shape == (N, N_BETA)
    assert beta.shape == (N, N_BETA)
    # Tolerances allow for MXU default f32 matmul precision differences between
    # the Mosaic kernel and the XLA reference on real hardware.
    assert jnp.allclose(pi, pi_r, atol=1e-2, rtol=1e-2)
    assert jnp.allclose(alpha, alpha_r, atol=1e-2, rtol=1e-2)
    assert jnp.allclose(beta, beta_r, atol=1e-2, rtol=1e-2)
    # Exact (non-approx) reciprocal in the softmax -> rows sum to 1 tightly.
    assert jnp.allclose(jnp.sum(pi, axis=-1), 1.0, atol=1e-3)

    print("KERNEL_OK")
</pallas_src>

<mosaic_0001>
module attributes {stable_mosaic.version = 11 : i64} {
  func.func @mdn_kernel(%arg0: i32, %arg1: memref<8x256xf32, #tpu.memory_space<vmem>>, %arg2: memref<32x8xf32, #tpu.memory_space<vmem>>, %arg3: memref<32x32xf32, #tpu.memory_space<vmem>>, %arg4: memref<32x1xf32, #tpu.memory_space<vmem>>, %arg5: memref<24x32xf32, #tpu.memory_space<vmem>>, %arg6: memref<24x1xf32, #tpu.memory_space<vmem>>, %arg7: memref<24x256xf32, #tpu.memory_space<vmem>>) attributes {dimension_semantics = [#tpu.dimension_semantics<parallel>], iteration_bounds = array<i64: 2>, scalar_prefetch = 0 : i64, scratch_operands = 0 : i64, tpu.core_type = #tpu.core_type<tc>, window_params = [{transform_indices = @transform_0, window_bounds = array<i64: 8, 256>}, {pipeline_mode = #tpu.pipeline_mode<synchronous>, transform_indices = @transform_1, window_bounds = array<i64: 32, 8>}, {pipeline_mode = #tpu.pipeline_mode<synchronous>, transform_indices = @transform_2, window_bounds = array<i64: 32, 32>}, {pipeline_mode = #tpu.pipeline_mode<synchronous>, transform_indices = @transform_3, window_bounds = array<i64: 32, 1>}, {pipeline_mode = #tpu.pipeline_mode<synchronous>, transform_indices = @transform_4, window_bounds = array<i64: 24, 32>}, {pipeline_mode = #tpu.pipeline_mode<synchronous>, transform_indices = @transform_5, window_bounds = array<i64: 24, 1>}, {transform_indices = @transform_6, window_bounds = array<i64: 24, 256>}]} {
    %c0 = arith.constant 0 : index
    %c0_0 = arith.constant 0 : index
    %0 = vector.load %arg1[%c0, %c0_0] : memref<8x256xf32, #tpu.memory_space<vmem>>, vector<8x256xf32>
    %c0_1 = arith.constant 0 : index
    %c0_2 = arith.constant 0 : index
    %1 = vector.load %arg2[%c0_1, %c0_2] : memref<32x8xf32, #tpu.memory_space<vmem>>, vector<32x8xf32>
    %cst = arith.constant dense<0.000000e+00> : vector<32x256xf32>
    %2 = tpu.matmul %1, %0, %cst {dimension_numbers = #tpu.dot_dimension_numbers<[1], [0], [0], [1], [0, 0, 1, 1], [], []>} : vector<32x8xf32>, vector<8x256xf32>, vector<32x256xf32> -> vector<32x256xf32>
    %3 = math.tanh %2 : vector<32x256xf32>
    %c0_3 = arith.constant 0 : index
    %c0_4 = arith.constant 0 : index
    %4 = vector.load %arg3[%c0_3, %c0_4] : memref<32x32xf32, #tpu.memory_space<vmem>>, vector<32x32xf32>
    %cst_5 = arith.constant dense<0.000000e+00> : vector<32x256xf32>
    %5 = tpu.matmul %4, %3, %cst_5 {dimension_numbers = #tpu.dot_dimension_numbers<[1], [0], [0], [1], [0, 0, 1, 1], [], []>} : vector<32x32xf32>, vector<32x256xf32>, vector<32x256xf32> -> vector<32x256xf32>
    %c0_6 = arith.constant 0 : index
    %c0_7 = arith.constant 0 : index
    %6 = vector.load %arg4[%c0_6, %c0_7] : memref<32x1xf32, #tpu.memory_space<vmem>>, vector<32x1xf32>
    %7 = vector.broadcast %6 : vector<32x1xf32> to vector<32x256xf32>
    %8 = arith.addf %5, %7 : vector<32x256xf32>
    %9 = math.tanh %8 : vector<32x256xf32>
    %c0_8 = arith.constant 0 : index
    %c0_9 = arith.constant 0 : index
    %10 = vector.load %arg5[%c0_8, %c0_9] : memref<24x32xf32, #tpu.memory_space<vmem>>, vector<24x32xf32>
    %cst_10 = arith.constant dense<0.000000e+00> : vector<24x256xf32>
    %11 = tpu.matmul %10, %9, %cst_10 {dimension_numbers = #tpu.dot_dimension_numbers<[1], [0], [0], [1], [0, 0, 1, 1], [], []>} : vector<24x32xf32>, vector<32x256xf32>, vector<24x256xf32> -> vector<24x256xf32>
    %c0_11 = arith.constant 0 : index
    %c0_12 = arith.constant 0 : index
    %12 = vector.load %arg6[%c0_11, %c0_12] : memref<24x1xf32, #tpu.memory_space<vmem>>, vector<24x1xf32>
    %13 = vector.broadcast %12 : vector<24x1xf32> to vector<24x256xf32>
    %14 = arith.addf %11, %13 : vector<24x256xf32>
    %15 = vector.extract_strided_slice %14 {offsets = [0, 0], sizes = [8, 256], strides = [1, 1]} : vector<24x256xf32> to vector<8x256xf32>
    %cst_13 = arith.constant dense<0xFF800000> : vector<256xf32>
    %16 = vector.multi_reduction <maximumf>, %15, %cst_13 [0] : vector<8x256xf32> to vector<256xf32>
    %17 = vector.shape_cast %16 : vector<256xf32> to vector<1x256xf32>
    %18 = vector.broadcast %17 : vector<1x256xf32> to vector<8x256xf32>
    %19 = arith.subf %15, %18 : vector<8x256xf32>
    %20 = math.exp %19 : vector<8x256xf32>
    %cst_14 = arith.constant dense<0.000000e+00> : vector<256xf32>
    %21 = vector.multi_reduction <add>, %20, %cst_14 [0] : vector<8x256xf32> to vector<256xf32>
    %22 = vector.shape_cast %21 : vector<256xf32> to vector<1x256xf32>
    %23 = tpu.reciprocal %22 : vector<1x256xf32> -> vector<1x256xf32>
    %24 = vector.broadcast %23 : vector<1x256xf32> to vector<8x256xf32>
    %25 = arith.mulf %20, %24 : vector<8x256xf32>
    %c0_15 = arith.constant 0 : index
    %c0_16 = arith.constant 0 : index
    %26 = vector.load %arg7[%c0_15, %c0_16] : memref<24x256xf32, #tpu.memory_space<vmem>>, vector<8x256xf32>
    tpu.vector_store %arg7[%c0_15, %c0_16], %25 {strides = array<i32>} : memref<24x256xf32, #tpu.memory_space<vmem>>, vector<8x256xf32>,
    %27 = vector.extract_strided_slice %14 {offsets = [8, 0], sizes = [16, 256], strides = [1, 1]} : vector<24x256xf32> to vector<16x256xf32>
    %28 = math.exp %27 : vector<16x256xf32>
    %c8 = arith.constant 8 : index
    %c0_17 = arith.constant 0 : index
    %29 = vector.load %arg7[%c8, %c0_17] : memref<24x256xf32, #tpu.memory_space<vmem>>, vector<16x256xf32>
    tpu.vector_store %arg7[%c8, %c0_17], %28 {strides = array<i32>} : memref<24x256xf32, #tpu.memory_space<vmem>>, vector<16x256xf32>,
    return
  }
  func.func @transform_0(%arg0: i32) -> (i32, i32) {
    %c0_i32 = arith.constant 0 : i32
    %c0_i32_0 = arith.constant 0 : i32
    return %c0_i32, %arg0 : i32, i32
  }
  func.func @transform_1(%arg0: i32) -> (i32, i32) {
    %c0_i32 = arith.constant 0 : i32
    %c0_i32_0 = arith.constant 0 : i32
    %c0_i32_1 = arith.constant 0 : i32
    return %c0_i32, %c0_i32_0 : i32, i32
  }
  func.func @transform_2(%arg0: i32) -> (i32, i32) {
    %c0_i32 = arith.constant 0 : i32
    %c0_i32_0 = arith.constant 0 : i32
    %c0_i32_1 = arith.constant 0 : i32
    return %c0_i32, %c0_i32_0 : i32, i32
  }
  func.func @transform_3(%arg0: i32) -> (i32, i32) {
    %c0_i32 = arith.constant 0 : i32
    %c0_i32_0 = arith.constant 0 : i32
    %c0_i32_1 = arith.constant 0 : i32
    return %c0_i32, %c0_i32_0 : i32, i32
  }
  func.func @transform_4(%arg0: i32) -> (i32, i32) {
    %c0_i32 = arith.constant 0 : i32
    %c0_i32_0 = arith.constant 0 : i32
    %c0_i32_1 = arith.constant 0 : i32
    return %c0_i32, %c0_i32_0 : i32, i32
  }
  func.func @transform_5(%arg0: i32) -> (i32, i32) {
    %c0_i32 = arith.constant 0 : i32
    %c0_i32_0 = arith.constant 0 : i32
    %c0_i32_1 = arith.constant 0 : i32
    return %c0_i32, %c0_i32_0 : i32, i32
  }
  func.func @transform_6(%arg0: i32) -> (i32, i32) {
    %c0_i32 = arith.constant 0 : i32
    %c0_i32_0 = arith.constant 0 : i32
    return %c0_i32, %arg0 : i32, i32
  }
}

</mosaic_0001>

<llo_original>
// kernel: _mdn_forward_impl.2
$region0: #{_mdn_forward_impl.2}
  #allocation0 [shape = 'u32[]', space=smem, size = 0x4, offset = 0x4, fixed_abs, tag = 'smem constant byte address 0x4 - core index']
  #allocation1 [shape = 'u32[144,128]{1,0:T(1,128)}', space=vmem, size = 0x12000, scoped, tag = 'internal scratch']
  #allocation2 [shape = 'u32[2048]{0}', space=vmem, size = 0x2000, scoped, tag = 'scoped memory for _mdn_forward_impl.2']
  #allocation3 [shape = 'u32[2048]{0}', space=vmem, size = 0x2000, scoped, tag = 'scoped memory for _mdn_forward_impl.2']
  #allocation4 [shape = 'u32[2048]{0}', space=vmem, size = 0x2000, scoped, tag = 'scoped memory for _mdn_forward_impl.2']
  #allocation5 [shape = 'u32[2048]{0}', space=vmem, size = 0x2000, scoped, tag = 'scoped memory for _mdn_forward_impl.2']
  #allocation6 [shape = 'u32[2048]{0}', space=vmem, size = 0x2000, scoped, tag = 'scoped memory for _mdn_forward_impl.2']
  %s0 = inlined_call_operand.vmem [shape: f32[32,8], index: 0, kind: input, shape index: {}]
  %s1 = inlined_call_operand.vmem [shape: f32[32,32], index: 1, kind: input, shape index: {}]
  %s2 = inlined_call_operand.vmem [shape: f32[32,1], index: 2, kind: input, shape index: {}]
  %s3 = inlined_call_operand.vmem [shape: f32[24,32], index: 3, kind: input, shape index: {}]
  %s4 = inlined_call_operand.vmem [shape: f32[24,1], index: 4, kind: input, shape index: {}]
  %s5 = inlined_call_operand.vmem [shape: f32[3,300], index: 5, kind: input, shape index: {}]
  %s6 = inlined_call_operand.<no memory space> [shape: f32[], index: 6, kind: input, shape index: {}]
  %s7 = inlined_call_operand.<no memory space> [shape: s32[], index: 7, kind: input, shape index: {}]
  %s8 = inlined_call_operand.<no memory space> [shape: f32[], index: 8, kind: input, shape index: {}]
  %s9 = inlined_call_operand.<no memory space> [shape: s32[], index: 9, kind: input, shape index: {}]
  %s10 = inlined_call_operand.vmem [shape: f32[24,512], index: 10, kind: output, shape index: {}]
  %s11 = sld [smem:[#allocation0]]
  $region76: #{_mdn_forward_impl.2} parent=0
    _
  %s13 = ssub.s32 1, %s11
  %s14 = scalar_select 0, %s13, %s11
  %v15 = vstv %s6
  %v16 = vstv %s7
  %v17 = vstv %s8
  %v18 = vstv %s9
  $region1: #{_mdn_forward_impl.2} parent=0
    #allocation7 [shape = 'u8[49152]{0}', space=vmem, size = 0xc000, scoped, tag = 'output window, operand 0']
    loop: start=0, step=1, limit=4
    $region2: #{_mdn_forward_impl.2} parent=1 // loop_pre_header
      _
    $region3: #{_mdn_forward_impl.2} parent=1 // loop_header
      %s20 = sphi 0, %s24
      %p21 = scmp.ge.s32.totalorder %s20, 4
      %s30 = sphi 0, %s32
      %s33 = sphi 0, %s30
      %s34 = sphi 0, %s33
      %s50 = sphi 0, %s34
      %s54 = sphi 0, %s54
      %s56 = sphi 0, %s54
      %s57 = sphi 0, %s56
      %s71 = sphi 0, %s57
      %s75 = sphi 0, %s75
      %s77 = sphi 0, %s75
      %s78 = sphi 0, %s77
      %s92 = sphi 0, %s78
      %s96 = sphi 0, %s96
      %s98 = sphi 0, %s96
      %s99 = sphi 0, %s98
      %s113 = sphi 0, %s99
      %s117 = sphi 0, %s117
      %s119 = sphi 0, %s117
      %s120 = sphi 0, %s119
      %s134 = sphi 0, %s120
      %s138 = sphi 0, %s138
      %s140 = sphi 0, %s138
      %s141 = sphi 0, %s140
      %s155 = sphi 0, %s141
      %s161 = sphi 0, %s163
      %s164 = sphi 0, %s161
      %s165 = sphi 0, %s164
      %s181 = sphi 0, %s165
    $region4: #{_mdn_forward_impl.2} parent=1 // loop_header_branch
      %23 = sbr.rel (%p21) target = $region8
    $region5: #{_mdn_forward_impl.2} parent=1 // loop_body
      %s25 = ssub.s32 %s20, 1
      %s26 = ssub.s32 %s20, 2
      %s27 = sadd.s32 %s20, 1
      %s28 = ssub.s32 %s20, %s27
      %p29 = scmp.eq.s32.totalorder %s28, 0
      %s31 = sadd.s32 %s30, 1
      %s32 = scalar_select %p29, %s30, %s31
      %p35 = pneg %p29
      %p36 = scmp.eq.s32.totalorder %s20, 1
      %p37 = por %p35, %p36
      %p38 = scmp.ne.s32.totalorder %s30, %s33
      %p39 = scmp.eq.s32.totalorder %s20, 0
      %p40 = por %p38, %p39
      %p41 = scmp.ne.s32.totalorder %s30, %s33
      %p42 = scmp.eq.s32.totalorder %s25, 1
      %p43 = por %p41, %p42
      %p44 = scmp.ne.s32.totalorder %s33, %s34
      %p45 = scmp.eq.s32.totalorder %s25, 0
      %p46 = por %p44, %p45
      %p47 = scmp.ne.s32.totalorder %s33, %s34
      %p48 = scmp.eq.s32.totalorder %s26, 1
      %p49 = por %p47, %p48
      %p51 = scmp.ne.s32.totalorder %s34, %s50
      %p52 = scmp.eq.s32.totalorder %s26, 0
      %p53 = por %p51, %p52
      %s55 = sadd.s32 %s54, 1
      %p58 = scmp.eq.s32.totalorder %s20, 1
      %p59 = scmp.ne.s32.totalorder %s54, %s56
      %p60 = scmp.eq.s32.totalorder %s20, 0
      %p61 = por %p59, %p60
      %p62 = scmp.ne.s32.totalorder %s54, %s56
      %p63 = scmp.eq.s32.totalorder %s25, 1
      %p64 = por %p62, %p63
      %p65 = scmp.ne.s32.totalorder %s56, %s57
      %p66 = scmp.eq.s32.totalorder %s25, 0
      %p67 = por %p65, %p66
      %p68 = scmp.ne.s32.totalorder %s56, %s57
      %p69 = scmp.eq.s32.totalorder %s26, 1
      %p70 = por %p68, %p69
      %p72 = scmp.ne.s32.totalorder %s57, %s71
      %p73 = scmp.eq.s32.totalorder %s26, 0
      %p74 = por %p72, %p73
      %s76 = sadd.s32 %s75, 1
      %p79 = scmp.eq.s32.totalorder %s20, 1
      %p80 = scmp.ne.s32.totalorder %s75, %s77
      %p81 = scmp.eq.s32.totalorder %s20, 0
      %p82 = por %p80, %p81
      %p83 = scmp.ne.s32.totalorder %s75, %s77
      %p84 = scmp.eq.s32.totalorder %s25, 1
      %p85 = por %p83, %p84
      %p86 = scmp.ne.s32.totalorder %s77, %s78
      %p87 = scmp.eq.s32.totalorder %s25, 0
      %p88 = por %p86, %p87
      %p89 = scmp.ne.s32.totalorder %s77, %s78
      %p90 = scmp.eq.s32.totalorder %s26, 1
      %p91 = por %p89, %p90
      %p93 = scmp.ne.s32.totalorder %s78, %s92
      %p94 = scmp.eq.s32.totalorder %s26, 0
      %p95 = por %p93, %p94
      %s97 = sadd.s32 %s96, 1
      %p100 = scmp.eq.s32.totalorder %s20, 1
      %p101 = scmp.ne.s32.totalorder %s96, %s98
      %p102 = scmp.eq.s32.totalorder %s20, 0
      %p103 = por %p101, %p102
      %p104 = scmp.ne.s32.totalorder %s96, %s98
      %p105 = scmp.eq.s32.totalorder %s25, 1
      %p106 = por %p104, %p105
      %p107 = scmp.ne.s32.totalorder %s98, %s99
      %p108 = scmp.eq.s32.totalorder %s25, 0
      %p109 = por %p107, %p108
      %p110 = scmp.ne.s32.totalorder %s98, %s99
      %p111 = scmp.eq.s32.totalorder %s26, 1
      %p112 = por %p110, %p111
      %p114 = scmp.ne.s32.totalorder %s99, %s113
      %p115 = scmp.eq.s32.totalorder %s26, 0
      %p116 = por %p114, %p115
      %s118 = sadd.s32 %s117, 1
      %p121 = scmp.eq.s32.totalorder %s20, 1
      %p122 = scmp.ne.s32.totalorder %s117, %s119
      %p123 = scmp.eq.s32.totalorder %s20, 0
      %p124 = por %p122, %p123
      %p125 = scmp.ne.s32.totalorder %s117, %s119
      %p126 = scmp.eq.s32.totalorder %s25, 1
      %p127 = por %p125, %p126
      %p128 = scmp.ne.s32.totalorder %s119, %s120
      %p129 = scmp.eq.s32.totalorder %s25, 0
      %p130 = por %p128, %p129
      %p131 = scmp.ne.s32.totalorder %s119, %s120
      %p132 = scmp.eq.s32.totalorder %s26, 1
      %p133 = por %p131, %p132
      %p135 = scmp.ne.s32.totalorder %s120, %s134
      %p136 = scmp.eq.s32.totalorder %s26, 0
      %p137 = por %p135, %p136
      %s139 = sadd.s32 %s138, 1
      %p142 = scmp.eq.s32.totalorder %s20, 1
      %p143 = scmp.ne.s32.totalorder %s138, %s140
      %p144 = scmp.eq.s32.totalorder %s20, 0
      %p145 = por %p143, %p144
      %p146 = scmp.ne.s32.totalorder %s138, %s140
      %p147 = scmp.eq.s32.totalorder %s25, 1
      %p148 = por %p146, %p147
      %p149 = scmp.ne.s32.totalorder %s140, %s141
      %p150 = scmp.eq.s32.totalorder %s25, 0
      %p151 = por %p149, %p150
      %p152 = scmp.ne.s32.totalorder %s140, %s141
      %p153 = scmp.eq.s32.totalorder %s26, 1
      %p154 = por %p152, %p153
      %p156 = scmp.ne.s32.totalorder %s141, %s155
      %p157 = scmp.eq.s32.totalorder %s26, 0
      %p158 = por %p156, %p157
      %s159 = ssub.s32 %s20, %s27
      %p160 = scmp.eq.s32.totalorder %s159, 0
      %s162 = sadd.s32 %s161, 1
      %s163 = scalar_select %p160, %s161, %s162
      %p166 = pneg %p160
      %p167 = scmp.eq.s32.totalorder %s20, 1
      %p168 = por %p166, %p167
      %p169 = scmp.ne.s32.totalorder %s161, %s164
      %p170 = scmp.eq.s32.totalorder %s20, 0
      %p171 = por %p169, %p170
      %p172 = scmp.ne.s32.totalorder %s161, %s164
      %p173 = scmp.eq.s32.totalorder %s25, 1
      %p174 = por %p172, %p173
      %p175 = scmp.ne.s32.totalorder %s164, %s165
      %p176 = scmp.eq.s32.totalorder %s25, 0
      %p177 = por %p175, %p176
      %p178 = scmp.ne.s32.totalorder %s164, %s165
      %p179 = scmp.eq.s32.totalorder %s26, 1
      %p180 = por %p178, %p179
      %p182 = scmp.ne.s32.totalorder %s165, %s181
      %p183 = scmp.eq.s32.totalorder %s26, 0
      %p184 = por %p182, %p183
      %p185 = scmp.le.s32.totalorder 1, %s20
      %p186 = scmp.lt.s32.totalorder %s20, 3
      %p187 = pnand %p185, %p186
      %p188 = pneg %p187
      // Predicated region
      $region9: #{_mdn_forward_impl.2} parent=5 // pred_check
        _
      $region10: #{_mdn_forward_impl.2} parent=5 // pred_check_branch
        %190 = sbr.rel (%p187) target = $region12
      $region11: #{_mdn_forward_impl.2} parent=5 // pred_region
        %s191 = ssub.s32 %s20, 1
        // Predicated region
        $region13: #{_mdn_forward_impl.2} parent=11 // pred_check
          %p192 = pneg %p67
        $region14: #{_mdn_forward_impl.2} parent=11 // pred_check_branch
          %194 = sbr.rel (%p192) target = $region16
        $region15: #{_mdn_forward_impl.2} parent=11 // pred_region
          _
        $region16: #{_mdn_forward_impl.2} parent=11 // pred_fallthru
          _
        // Predicated region
        $region17: #{_mdn_forward_impl.2} parent=11 // pred_check
          %p195 = pneg %p88
        $region18: #{_mdn_forward_impl.2} parent=11 // pred_check_branch
          %197 = sbr.rel (%p195) target = $region20
        $region19: #{_mdn_forward_impl.2} parent=11 // pred_region
          _
        $region20: #{_mdn_forward_impl.2} parent=11 // pred_fallthru
          _
        // Predicated region
        $region21: #{_mdn_forward_impl.2} parent=11 // pred_check
          %p198 = pneg %p109
        $region22: #{_mdn_forward_impl.2} parent=11 // pred_check_branch
          %200 = sbr.rel (%p198) target = $region24
        $region23: #{_mdn_forward_impl.2} parent=11 // pred_region
          _
        $region24: #{_mdn_forward_impl.2} parent=11 // pred_fallthru
          _
        // Predicated region
        $region25: #{_mdn_forward_impl.2} parent=11 // pred_check
          %p201 = pneg %p130
        $region26: #{_mdn_forward_impl.2} parent=11 // pred_check_branch
          %203 = sbr.rel (%p201) target = $region28
        $region27: #{_mdn_forward_impl.2} parent=11 // pred_region
          _
        $region28: #{_mdn_forward_impl.2} parent=11 // pred_fallthru
          _
        // Predicated region
        $region29: #{_mdn_forward_impl.2} parent=11 // pred_check
          %p204 = pneg %p151
        $region30: #{_mdn_forward_impl.2} parent=11 // pred_check_branch
          %206 = sbr.rel (%p204) target = $region32
        $region31: #{_mdn_forward_impl.2} parent=11 // pred_region
          _
        $region32: #{_mdn_forward_impl.2} parent=11 // pred_fallthru
          _
      $region12: #{_mdn_forward_impl.2} parent=5 // pred_fallthru
        _
      %p207 = scmp.lt.s32.totalorder %s20, 2
      // Predicated region
      $region33: #{_mdn_forward_impl.2} parent=5 // pred_check
        %p208 = pneg %p207
      $region34: #{_mdn_forward_impl.2} parent=5 // pred_check_branch
        %210 = sbr.rel (%p208) target = $region36
      $region35: #{_mdn_forward_impl.2} parent=5 // pred_region
        // Predicated region
        $region37: #{_mdn_forward_impl.2} parent=35 // pred_check
          %p211 = pneg %p40
        $region38: #{_mdn_forward_impl.2} parent=35 // pred_check_branch
          %213 = sbr.rel (%p211) target = $region40
        $region39: #{_mdn_forward_impl.2} parent=35 // pred_region
          %s214 = smul.u32 2, %s20
          %s215 = ssub.s32 3, %s214
          %p216 = scmp.lt.s32.totalorder %s215, 2
          %s217 = scalar_select %p216, %s215, 2
          %s218 = smul.u32 64, %s217
          %p219 = scmp.lt.s32.totalorder %s214, 2
          %s220 = scalar_select %p219, %s214, 2
          %s221 = smul.addr %s220, 4
          %s222 = scalar_lea.vmem %s5, %s221
          %s223 = smul.u32 2, %s20
          %s224 = ssub.s32 3, %s223
          %p225 = scmp.lt.s32.totalorder %s224, 2
          %s226 = scalar_select %p225, %s224, 2
          %s227 = smul.u32 64, %s226
        $region40: #{_mdn_forward_impl.2} parent=35 // pred_fallthru
          _
      $region36: #{_mdn_forward_impl.2} parent=5 // pred_fallthru
        _
      %p228 = scmp.le.s32.totalorder 1, %s20
      %p229 = scmp.lt.s32.totalorder %s20, 3
      %p230 = pnand %p228, %p229
      %p231 = pneg %p230
      // Predicated region
      $region41: #{_mdn_forward_impl.2} parent=5 // pred_check
        _
      $region42: #{_mdn_forward_impl.2} parent=5 // pred_check_branch
        %233 = sbr.rel (%p230) target = $region44
      $region43: #{_mdn_forward_impl.2} parent=5 // pred_region
        #allocation8 [shape = 'u8[8192]{0}', space=vmem, size = 0x2000, dematerialized = true, scoped, tag = 'FusionAdapter Buffer %fusion.1 = f32[8,512]{1,0:T(8,128)} fusion(%param_5.7, %param_6.4, %param_7.6, %param_8.5, %param_9.5), kind=kLoop, calls=%fused_computation.1.clone, metadata={op_name="jit(_mdn_forward_impl)/jit(_pad)/pad" stack_frame_id=10}']
        %s234 = ssub.s32 %s20, 1
        %s235 = smul.u32 2, %s25
        %s236 = ssub.s32 3, %s235
        %p237 = scmp.lt.s32.totalorder %s236, 2
        %s238 = scalar_select %p237, %s236, 2
        %s239 = smul.u32 64, %s238
        %p240 = scmp.lt.s32.totalorder %s235, 2
        %s241 = scalar_select %p240, %s235, 2
        %s242 = smul.addr %s241, 4
        %s243 = scalar_lea.vmem %s5, %s242
        %p244 = pneg %p46
        %p245 = pneg %p43
        %p246 = pneg %p67
        %p247 = pneg %p64
        %p248 = pneg %p88
        %p249 = pneg %p85
        %p250 = pneg %p109
        %p251 = pneg %p106
        %p252 = pneg %p130
        %p253 = pneg %p127
        %p254 = pneg %p151
        %p255 = pneg %p148
        %p256 = pneg %p177
        %p257 = pneg %p174
        %s258 = sand.u32 %s164, 1
        %s259 = sand.u32 %s164, 1
        %s260 = smul.addr %s259, 48
        %s261 = scalar_lea.vmem [#allocation7], %s260
        %s262 = smul.u32 2, %s25
        %s263 = ssub.s32 3, %s262
        %p264 = scmp.lt.s32.totalorder %s263, 2
        %s265 = scalar_select %p264, %s263, 2
        %s266 = smul.u32 64, %s265
        %p267 = scmp.lt.s32.totalorder %s262, 2
        %s268 = scalar_select %p267, %s262, 2
        %s269 = smul.addr %s268, 4
        %s270 = scalar_lea.vmem %s5, %s269
        %s271 = smul.u32 2, %s25
        %s272 = ssub.s32 3, %s271
        %p273 = scmp.lt.s32.totalorder %s272, 2
        %s274 = scalar_select %p273, %s272, 2
        %s275 = smul.u32 64, %s274
        %s276 = smul.u32 2, %s25
        %s277 = smul.u32 2, %s25
        %s278 = smul.u32 2, %s25
        %s279 = smul.u32 2, %s25
        %s280 = ssub.s32 2, %s271
        %p281 = scmp.lt.s32.totalorder %s280, 0
        %s282 = scalar_select %p281, 0, 255
        %s283 = sand.u32 15, %s282
        %s284 = sand.u32 7, %s283
        %v285 = vld [vmem:[%s270] sm:%s284]
        %s286 = ssub.s32 2, %s271
        %v287 = vstv %s286
        %vm288 = vcmp.lt.s32.totalorder %v287, 0
        %v289 = vsel %vm288, %v15, %v285
        %v290 = vlaneseq
        %v291 = vshrl.u32 %v290, 7
        %vm293 = vcmp.lt.s32.totalorder %v291, 3
        %v294 = vsel %vm293, %v289, %v15
        %s295 = smul.addr %s271, 128
        %v296 = vlaneseq
        %v297 = vand.u32 %v296, 127
        %v298 = vstv %s295
        %v299 = vadd.s32 %v297, %v298
        %vm300 = vcmp.lt.s32.totalorder %v299, 300
        %v301 = vsel %vm300, %v294, %v15
        %v302 = vlaneseq
        %v303 = vshrl.u32 %v302, 7
        %306 = xla_tuple %v303, %v18
        %307 = xla_tuple %306
        %vm308 = vcmp.lt.s32.totalorder %v303, %v18
        %v309 = vsel %vm308, 1, 0
        %310 = xla_tuple %v309
        %s311 = smul.u32 256, %s25
        %v312 = vlaneseq
        %v313 = vand.u32 %v312, 127
        %v314 = vstv %s311
        %v315 = vadd.s32 %v313, %v314
        %317 = xla_tuple %v315, %v16
        %318 = xla_tuple %317
        %vm319 = vcmp.lt.s32.totalorder %v315, %v16
        %v320 = vsel %vm319, 1, 0
        %321 = xla_tuple %v320
        %v322 = vand.u32 %v309, %v320
        %323 = xla_tuple %v309, %v301, %v17
        %324 = xla_tuple %323
        %v325 = vsel %vm308, %v301, %v17
        %326 = xla_tuple %v325
        %327 = xla_tuple %v322, %v325, %v17
        %328 = xla_tuple %327
        %vm329 = vcmp.ne.s32.totalorder %v322, 0
        %v330 = vsel %vm329, %v325, %v17
        %331 = xla_tuple %v330
        %333 = vst [vmem:[#allocation8] sm:$0xff] %v330
        %s334 = scalar_lea.vmem %s270, 4
        %s335 = sadd.s32 %s271, 1
        %s336 = ssub.s32 2, %s335
        %p337 = scmp.lt.s32.totalorder %s336, 0
        %s338 = scalar_select %p337, 0, 255
        %s339 = sand.u32 15, %s338
        %s340 = sand.u32 7, %s339
        %v341 = vld [vmem:[%s334] sm:%s340]
        %s342 = sadd.s32 %s271, 1
        %s343 = ssub.s32 2, %s342
        %v344 = vstv %s343
        %vm345 = vcmp.lt.s32.totalorder %v344, 0
        %v346 = vsel %vm345, %v15, %v341
        %v347 = vlaneseq
        %v348 = vshrl.u32 %v347, 7
        %vm350 = vcmp.lt.s32.totalorder %v348, 3
        %v351 = vsel %vm350, %v346, %v15
        %s352 = sadd.s32 %s271, 1
        %s353 = smul.addr %s352, 128
        %v354 = vlaneseq
        %v355 = vand.u32 %v354, 127
        %v356 = vstv %s353
        %v357 = vadd.s32 %v355, %v356
        %vm358 = vcmp.lt.s32.totalorder %v357, 300
        %v359 = vsel %vm358, %v351, %v15
        %v360 = vlaneseq
        %v361 = vshrl.u32 %v360, 7
        %364 = xla_tuple %v361, %v18
        %365 = xla_tuple %364
        %vm366 = vcmp.lt.s32.totalorder %v361, %v18
        %v367 = vsel %vm366, 1, 0
        %368 = xla_tuple %v367
        %s369 = smul.u32 256, %s25
        %v370 = vlaneseq
        %v371 = vand.u32 %v370, 127
        %v372 = vstv %s369
        %v373 = vadd.s32 %v371, %v372
        %v374 = vadd.s32 %v373, 128
        %375 = xla_tuple %v374, %v16
        %376 = xla_tuple %375
        %vm377 = vcmp.lt.s32.totalorder %v374, %v16
        %v378 = vsel %vm377, 1, 0
        %379 = xla_tuple %v378
        %v380 = vand.u32 %v367, %v378
        %381 = xla_tuple %v367, %v359, %v17
        %382 = xla_tuple %381
        %v383 = vsel %vm366, %v359, %v17
        %384 = xla_tuple %v383
        %385 = xla_tuple %v380, %v383, %v17
        %386 = xla_tuple %385
        %vm387 = vcmp.ne.s32.totalorder %v380, 0
        %v388 = vsel %vm387, %v383, %v17
        %389 = xla_tuple %v388
        %s390 = scalar_lea.vmem [#allocation8], 8
        %392 = vst [vmem:[%s390] sm:$0xff] %v388
        %v393 = vld [vmem:[#allocation8] sm:$0xff]
        %v394 = vld [vmem:[#allocation8 + $0x8] sm:$0xff]
        %v395 = vld [vmem:[%s0] sm:$0xff]
        %v396 = vld [vmem:[%s0 + $0x8] sm:$0xff]
        %v397 = vld [vmem:[%s0 + $0x10] sm:$0xff]
        %v398 = vld [vmem:[%s0 + $0x18] sm:$0xff]
        %vm399 = vcmask 64512
        %v401 = vsel %vm399, %v395, 0
        %v404 = vsel %vm399, %v396, 0
        %v407 = vsel %vm399, %v397, 0
        %v410 = vsel %vm399, %v398, 0
        %412 = vmatprep.subr.mxu0 %v394
        %413 = vmatpush1.msra.mxu0 %v393
        %414 = vmatprep.subr.mxu0 0.0
        %415 = vmatpush1.msra.mxu0 0.0
        %416 = vmatprep.subr.mxu0 0.0
        %417 = vmatpush1.msra.mxu0 0.0
        %418 = vmatprep.subr.mxu0 0.0
        %419 = vmatpush1.msra.mxu0 0.0
        %420 = vmatprep.subr.mxu0 0.0
        %421 = vmatpush1.msra.mxu0 0.0
        %422 = vmatprep.subr.mxu0 0.0
        %423 = vmatpush1.msra.mxu0 0.0
        %424 = vmatprep.subr.mxu0 0.0
        %425 = vmatpush1.msra.mxu0 0.0
        %426 = vmatprep.subr.mxu0 0.0
        %427 = vmatpush1.msra.mxu0 0.0
        %428 = vmatprep.subr.mxu0 0.0
        %429 = vmatpush1.msra.mxu0 0.0
        %430 = vmatprep.subr.mxu0 0.0
        %431 = vmatpush1.msra.mxu0 0.0
        %432 = vmatprep.subr.mxu0 0.0
        %433 = vmatpush1.msra.mxu0 0.0
        %434 = vmatprep.subr.mxu0 0.0
        %435 = vmatpush1.msra.mxu0 0.0
        %436 = vmatprep.subr.mxu0 0.0
        %437 = vmatpush1.msra.mxu0 0.0
        %438 = vmatprep.subr.mxu0 0.0
        %439 = vmatpush1.msra.mxu0 0.0
        %440 = vmatprep.subr.mxu0 0.0
        %441 = vmatpush1.msra.mxu0 0.0
        %442 = vmatprep.subr.mxu0 0.0
        %443 = vmatpush1.msra.mxu0 0.0
        %444 = vmatprep.subr.mxu0 0.0
        %445 = vmatpush1.msra.mxu0 0.0
        %446 = vmatprep.subr.mxu0 0.0
        %447 = vmatpush1.msra.mxu0 0.0
        %448 = vmatprep.subr.mxu0 0.0
        %449 = vmatpush1.msra.mxu0 0.0
        %450 = vmatprep.subr.mxu0 0.0
        %451 = vmatpush1.msra.mxu0 0.0
        %452 = vmatprep.subr.mxu0 0.0
        %453 = vmatpush1.msra.mxu0 0.0
        %454 = vmatprep.subr.mxu0 0.0
        %455 = vmatpush1.msra.mxu0 0.0
        %456 = vmatprep.subr.mxu0 0.0
        %457 = vmatpush1.msra.mxu0 0.0
        %458 = vmatprep.subr.mxu0 0.0
        %459 = vmatpush1.msra.mxu0 0.0
        %460 = vmatprep.subr.mxu0 0.0
        %461 = vmatpush1.msra.mxu0 0.0
        %462 = vmatprep.subr.mxu0 0.0
        %463 = vmatpush1.msra.mxu0 0.0
        %464 = vmatprep.subr.mxu0 0.0
        %465 = vmatpush1.msra.mxu0 0.0
        %466 = vmatprep.subr.mxu0 0.0
        %467 = vmatpush1.msra.mxu0 0.0
        %468 = vmatprep.subr.mxu0 0.0
        %469 = vmatpush1.msra.mxu0 0.0
        %470 = vmatprep.subr.mxu0 0.0
        %471 = vmatpush1.msra.mxu0 0.0
        %472 = vmatprep.subr.mxu0 0.0
        %473 = vmatpush1.msra.mxu0 0.0
        %474 = vmatprep.subr.mxu0 0.0
        %475 = vmatpush1.msra.mxu0 0.0
        %476 = vmatprep.mubr.f32.mxu0 0.0
        %477 = vmatmul.mubr.f32.gmra.mrb[0].mxu0 %v401
        %v478 = vpop.f32.mrb[0].mxu0
        %v479 = vadd.f32 0.0, %v478
        %v480 = vpop.f32.mrb[0].mxu0
        %v481 = vadd.f32 0.0, %v480
        %482 = vmatprep.mubr.f32.mxu0 0.0
        %483 = vmatmul.mubr.f32.gmra.mrb[0].mxu0 %v404
        %v484 = vpop.f32.mrb[0].mxu0
        %v485 = vadd.f32 0.0, %v484
        %v486 = vpop.f32.mrb[0].mxu0
        %v487 = vadd.f32 0.0, %v486
        %488 = vmatprep.mubr.f32.mxu0 0.0
        %489 = vmatmul.mubr.f32.gmra.mrb[0].mxu0 %v407
        %v490 = vpop.f32.mrb[0].mxu0
        %v491 = vadd.f32 0.0, %v490
        %v492 = vpop.f32.mrb[0].mxu0
        %v493 = vadd.f32 0.0, %v492
        %494 = vmatprep.mubr.f32.mxu0 0.0
        %495 = vmatmul.mubr.f32.gmra.mrb[0].mxu0 %v410
        %v496 = vpop.f32.mrb[0].mxu0
        %v497 = vadd.f32 0.0, %v496
        %v498 = vpop.f32.mrb[0].mxu0
        %v499 = vadd.f32 0.0, %v498
        %500 = vdwg.mxu0
        %v501 = vtanh.pop %v479
        %v502 = vtanh.pop %v481
        %v503 = vtanh.pop %v485
        %v504 = vtanh.pop %v487
        %v505 = vtanh.pop %v491
        %v506 = vtanh.pop %v493
        %v507 = vtanh.pop %v497
        %v508 = vtanh.pop %v499
        %v509 = vld [vmem:[%s1] sm:$0xff]
        %v510 = vld [vmem:[%s1 + $0x8] sm:$0xff]
        %v511 = vld [vmem:[%s1 + $0x10] sm:$0xff]
        %v512 = vld [vmem:[%s1 + $0x18] sm:$0xff]
        %v513 = vld [vmem:[%s2] sm:$0xff]
        %v514 = vld [vmem:[%s2 + $0x8] sm:$0xff]
        %v515 = vld [vmem:[%s2 + $0x10] sm:$0xff]
        %v516 = vld [vmem:[%s2 + $0x18] sm:$0xff]
        %518 = vset.pattern.permute.xlu0 0
        %519 = vperm.xlu0 %518, %v513
        %v520 = vpop.permute.xlu0 %519
        %523 = vset.pattern.permute.xlu0 0
        %524 = vperm.xlu0 %523, %v514
        %v525 = vpop.permute.xlu0 %524
        %528 = vset.pattern.permute.xlu0 0
        %529 = vperm.xlu0 %528, %v515
        %v530 = vpop.permute.xlu0 %529
        %533 = vset.pattern.permute.xlu0 0
        %534 = vperm.xlu0 %533, %v516
        %v535 = vpop.permute.xlu0 %534
        %vm537 = vcmask 261120
        %v539 = vsel %vm537, %v509, 0
        %v542 = vsel %vm537, %v510, 0
        %v545 = vsel %vm537, %v511, 0
        %v548 = vsel %vm537, %v512, 0
        %550 = vmatprep.subr.mxu0 %v502
        %551 = vmatpush1.msra.mxu0 %v501
        %552 = vmatprep.subr.mxu0 %v504
        %553 = vmatpush1.msra.mxu0 %v503
        %554 = vmatprep.subr.mxu0 %v506
        %555 = vmatpush1.msra.mxu0 %v505
        %556 = vmatprep.subr.mxu0 %v508
        %557 = vmatpush1.msra.mxu0 %v507
        %558 = vmatprep.subr.mxu0 0.0
        %559 = vmatpush1.msra.mxu0 0.0
        %560 = vmatprep.subr.mxu0 0.0
        %561 = vmatpush1.msra.mxu0 0.0
        %562 = vmatprep.subr.mxu0 0.0
        %563 = vmatpush1.msra.mxu0 0.0
        %564 = vmatprep.subr.mxu0 0.0
        %565 = vmatpush1.msra.mxu0 0.0
        %566 = vmatprep.subr.mxu0 0.0
        %567 = vmatpush1.msra.mxu0 0.0
        %568 = vmatprep.subr.mxu0 0.0
        %569 = vmatpush1.msra.mxu0 0.0
        %570 = vmatprep.subr.mxu0 0.0
        %571 = vmatpush1.msra.mxu0 0.0
        %572 = vmatprep.subr.mxu0 0.0
        %573 = vmatpush1.msra.mxu0 0.0
        %574 = vmatprep.subr.mxu0 0.0
        %575 = vmatpush1.msra.mxu0 0.0
        %576 = vmatprep.subr.mxu0 0.0
        %577 = vmatpush1.msra.mxu0 0.0
        %578 = vmatprep.subr.mxu0 0.0
        %579 = vmatpush1.msra.mxu0 0.0
        %580 = vmatprep.subr.mxu0 0.0
        %581 = vmatpush1.msra.mxu0 0.0
        %582 = vmatprep.subr.mxu0 0.0
        %583 = vmatpush1.msra.mxu0 0.0
        %584 = vmatprep.subr.mxu0 0.0
        %585 = vmatpush1.msra.mxu0 0.0
        %586 = vmatprep.subr.mxu0 0.0
        %587 = vmatpush1.msra.mxu0 0.0
        %588 = vmatprep.subr.mxu0 0.0
        %589 = vmatpush1.msra.mxu0 0.0
        %590 = vmatprep.subr.mxu0 0.0
        %591 = vmatpush1.msra.mxu0 0.0
        %592 = vmatprep.subr.mxu0 0.0
        %593 = vmatpush1.msra.mxu0 0.0
        %594 = vmatprep.subr.mxu0 0.0
        %595 = vmatpush1.msra.mxu0 0.0
        %596 = vmatprep.subr.mxu0 0.0
        %597 = vmatpush1.msra.mxu0 0.0
        %598 = vmatprep.subr.mxu0 0.0
        %599 = vmatpush1.msra.mxu0 0.0
        %600 = vmatprep.subr.mxu0 0.0
        %601 = vmatpush1.msra.mxu0 0.0
        %602 = vmatprep.subr.mxu0 0.0
        %603 = vmatpush1.msra.mxu0 0.0
        %604 = vmatprep.subr.mxu0 0.0
        %605 = vmatpush1.msra.mxu0 0.0
        %606 = vmatprep.subr.mxu0 0.0
        %607 = vmatpush1.msra.mxu0 0.0
        %608 = vmatprep.subr.mxu0 0.0
        %609 = vmatpush1.msra.mxu0 0.0
        %610 = vmatprep.subr.mxu0 0.0
        %611 = vmatpush1.msra.mxu0 0.0
        %612 = vmatprep.subr.mxu0 0.0
        %613 = vmatpush1.msra.mxu0 0.0
        %614 = vmatprep.mubr.f32.mxu0 0.0
        %615 = vmatmul.mubr.f32.gmra.mrb[0].mxu0 %v539
        %v616 = vpop.f32.mrb[0].mxu0
        %v617 = vadd.f32 %v520, %v616
        %v618 = vpop.f32.mrb[0].mxu0
        %v619 = vadd.f32 %v520, %v618
        %620 = vmatprep.mubr.f32.mxu0 0.0
        %621 = vmatmul.mubr.f32.gmra.mrb[0].mxu0 %v542
        %v622 = vpop.f32.mrb[0].mxu0
        %v623 = vadd.f32 %v525, %v622
        %v624 = vpop.f32.mrb[0].mxu0
        %v625 = vadd.f32 %v525, %v624
        %626 = vmatprep.mubr.f32.mxu0 0.0
        %627 = vmatmul.mubr.f32.gmra.mrb[0].mxu0 %v545
        %v628 = vpop.f32.mrb[0].mxu0
        %v629 = vadd.f32 %v530, %v628
        %v630 = vpop.f32.mrb[0].mxu0
        %v631 = vadd.f32 %v530, %v630
        %632 = vmatprep.mubr.f32.mxu0 0.0
        %633 = vmatmul.mubr.f32.gmra.mrb[0].mxu0 %v548
        %v634 = vpop.f32.mrb[0].mxu0
        %v635 = vadd.f32 %v535, %v634
        %v636 = vpop.f32.mrb[0].mxu0
        %v637 = vadd.f32 %v535, %v636
        %638 = vdwg.mxu0
        %v639 = vtanh.pop %v617
        %v640 = vtanh.pop %v619
        %v641 = vtanh.pop %v623
        %v642 = vtanh.pop %v625
        %v643 = vtanh.pop %v629
        %v644 = vtanh.pop %v631
        %v645 = vtanh.pop %v635
        %v646 = vtanh.pop %v637
        %v647 = vld [vmem:[%s3] sm:$0xff]
        %v648 = vld [vmem:[%s3 + $0x8] sm:$0xff]
        %v649 = vld [vmem:[%s3 + $0x10] sm:$0xff]
        %v650 = vld [vmem:[%s4] sm:$0xff]
        %v651 = vld [vmem:[%s4 + $0x8] sm:$0xff]
        %v652 = vld [vmem:[%s4 + $0x10] sm:$0xff]
        %654 = vset.pattern.permute.xlu0 0
        %655 = vperm.xlu0 %654, %v650
        %v656 = vpop.permute.xlu0 %655
        %659 = vset.pattern.permute.xlu0 0
        %660 = vperm.xlu0 %659, %v651
        %v661 = vpop.permute.xlu0 %660
        %664 = vset.pattern.permute.xlu0 0
        %665 = vperm.xlu0 %664, %v652
        %v666 = vpop.permute.xlu0 %665
        %v669 = vsel %vm537, %v647, 0
        %v672 = vsel %vm537, %v648, 0
        %v675 = vsel %vm537, %v649, 0
        %677 = vmatprep.subr.mxu0 %v640
        %678 = vmatpush1.msra.mxu0 %v639
        %679 = vmatprep.subr.mxu0 %v642
        %680 = vmatpush1.msra.mxu0 %v641
        %681 = vmatprep.subr.mxu0 %v644
        %682 = vmatpush1.msra.mxu0 %v643
        %683 = vmatprep.subr.mxu0 %v646
        %684 = vmatpush1.msra.mxu0 %v645
        %685 = vmatprep.subr.mxu0 0.0
        %686 = vmatpush1.msra.mxu0 0.0
        %687 = vmatprep.subr.mxu0 0.0
        %688 = vmatpush1.msra.mxu0 0.0
        %689 = vmatprep.subr.mxu0 0.0
        %690 = vmatpush1.msra.mxu0 0.0
        %691 = vmatprep.subr.mxu0 0.0
        %692 = vmatpush1.msra.mxu0 0.0
        %693 = vmatprep.subr.mxu0 0.0
        %694 = vmatpush1.msra.mxu0 0.0
        %695 = vmatprep.subr.mxu0 0.0
        %696 = vmatpush1.msra.mxu0 0.0
        %697 = vmatprep.subr.mxu0 0.0
        %698 = vmatpush1.msra.mxu0 0.0
        %699 = vmatprep.subr.mxu0 0.0
        %700 = vmatpush1.msra.mxu0 0.0
        %701 = vmatprep.subr.mxu0 0.0
        %702 = vmatpush1.msra.mxu0 0.0
        %703 = vmatprep.subr.mxu0 0.0
        %704 = vmatpush1.msra.mxu0 0.0
        %705 = vmatprep.subr.mxu0 0.0
        %706 = vmatpush1.msra.mxu0 0.0
        %707 = vmatprep.subr.mxu0 0.0
        %708 = vmatpush1.msra.mxu0 0.0
        %709 = vmatprep.subr.mxu0 0.0
        %710 = vmatpush1.msra.mxu0 0.0
        %711 = vmatprep.subr.mxu0 0.0
        %712 = vmatpush1.msra.mxu0 0.0
        %713 = vmatprep.subr.mxu0 0.0
        %714 = vmatpush1.msra.mxu0 0.0
        %715 = vmatprep.subr.mxu0 0.0
        %716 = vmatpush1.msra.mxu0 0.0
        %717 = vmatprep.subr.mxu0 0.0
        %718 = vmatpush1.msra.mxu0 0.0
        %719 = vmatprep.subr.mxu0 0.0
        %720 = vmatpush1.msra.mxu0 0.0
        %721 = vmatprep.subr.mxu0 0.0
        %722 = vmatpush1.msra.mxu0 0.0
        %723 = vmatprep.subr.mxu0 0.0
        %724 = vmatpush1.msra.mxu0 0.0
        %725 = vmatprep.subr.mxu0 0.0
        %726 = vmatpush1.msra.mxu0 0.0
        %727 = vmatprep.subr.mxu0 0.0
        %728 = vmatpush1.msra.mxu0 0.0
        %729 = vmatprep.subr.mxu0 0.0
        %730 = vmatpush1.msra.mxu0 0.0
        %731 = vmatprep.subr.mxu0 0.0
        %732 = vmatpush1.msra.mxu0 0.0
        %733 = vmatprep.subr.mxu0 0.0
        %734 = vmatpush1.msra.mxu0 0.0
        %735 = vmatprep.subr.mxu0 0.0
        %736 = vmatpush1.msra.mxu0 0.0
        %737 = vmatprep.subr.mxu0 0.0
        %738 = vmatpush1.msra.mxu0 0.0
        %739 = vmatprep.subr.mxu0 0.0
        %740 = vmatpush1.msra.mxu0 0.0
        %741 = vmatprep.mubr.f32.mxu0 0.0
        %742 = vmatmul.mubr.f32.gmra.mrb[0].mxu0 %v669
        %v743 = vpop.f32.mrb[0].mxu0
        %v744 = vadd.f32 %v656, %v743
        %v745 = vpop.f32.mrb[0].mxu0
        %v746 = vadd.f32 %v656, %v745
        %747 = vmatprep.mubr.f32.mxu0 0.0
        %748 = vmatmul.mubr.f32.gmra.mrb[0].mxu0 %v672
        %v749 = vpop.f32.mrb[0].mxu0
        %v750 = vadd.f32 %v661, %v749
        %v751 = vpop.f32.mrb[0].mxu0
        %v752 = vadd.f32 %v661, %v751
        %753 = vmatprep.mubr.f32.mxu0 0.0
        %754 = vmatmul.mubr.f32.gmra.mrb[0].mxu0 %v675
        %v755 = vpop.f32.mrb[0].mxu0
        %v756 = vadd.f32 %v666, %v755
        %v757 = vpop.f32.mrb[0].mxu0
        %v758 = vadd.f32 %v666, %v757
        %759 = vdwg.mxu0
        %v760 = vrot.slane %v744, 4
        %v761 = vmax.f32 %v744, %v760
        %v762 = vrot.slane %v761, 2
        %v763 = vmax.f32 %v761, %v762
        %v764 = vrot.slane %v763, 1
        %v765 = vmax.f32 %v763, %v764
        %v766 = vrot.slane %v746, 4
        %v767 = vmax.f32 %v746, %v766
        %v768 = vrot.slane %v767, 2
        %v769 = vmax.f32 %v767, %v768
        %v770 = vrot.slane %v769, 1
        %v771 = vmax.f32 %v769, %v770
        %v772 = vsub.f32 %v744, %v765
        %v773 = vsub.f32 %v746, %v771
        %v774 = vmul.f32 %v772, 1.442695
        %v775 = vpow.pop %v774
        %v776 = vmul.f32 %v773, 1.442695
        %v777 = vpow.pop %v776
        %v778 = vrot.slane %v775, 4
        %v779 = vadd.f32 %v775, %v778
        %v780 = vrot.slane %v779, 2
        %v781 = vadd.f32 %v779, %v780
        %v782 = vrot.slane %v781, 1
        %v783 = vadd.f32 %v781, %v782
        %v784 = vrot.slane %v777, 4
        %v785 = vadd.f32 %v777, %v784
        %v786 = vrot.slane %v785, 2
        %v787 = vadd.f32 %v785, %v786
        %v788 = vrot.slane %v787, 1
        %v789 = vadd.f32 %v787, %v788
        %v790 = vrcp.pop %v783
        %v791 = vrcp.pop %v789
        %v792 = vmul.f32 %v775, %v790
        %v793 = vmul.f32 %v777, %v791
        %794 = vst [vmem:[%s261] sm:$0xff] %v792
        %795 = vst [vmem:[%s261 + $0x8] sm:$0xff] %v793
        %v796 = vmul.f32 %v750, 1.442695
        %v797 = vpow.pop %v796
        %v798 = vmul.f32 %v752, 1.442695
        %v799 = vpow.pop %v798
        %v800 = vmul.f32 %v756, 1.442695
        %v801 = vpow.pop %v800
        %v802 = vmul.f32 %v758, 1.442695
        %v803 = vpow.pop %v802
        %804 = vst [vmem:[%s261 + $0x10] sm:$0xff] %v797
        %805 = vst [vmem:[%s261 + $0x18] sm:$0xff] %v799
        %806 = vst [vmem:[%s261 + $0x20] sm:$0xff] %v801
        %807 = vst [vmem:[%s261 + $0x28] sm:$0xff] %v803
        %s808 = sand.u32 %s164, 1
        %s809 = sand.u32 %s164, 1
        %s810 = smul.addr %s809, 48
        %s811 = scalar_lea.vmem [#allocation7], %s810
        // Predicated region
        $region45: #{_mdn_forward_impl.2} parent=43 // pred_check
          %p812 = pneg %p174
        $region46: #{_mdn_forward_impl.2} parent=43 // pred_check_branch
          %814 = sbr.rel (%p812) target = $region48
        $region47: #{_mdn_forward_impl.2} parent=43 // pred_region
          %s815 = smul.u32 2, %s25
          %s816 = smul.addr %s815, 8
          %s817 = scalar_lea.vmem %s10, %s816
          // Predicated region
          $region49: #{_mdn_forward_impl.2} parent=47 // pred_check
            _
          $region50: #{_mdn_forward_impl.2} parent=47 // pred_check_branch
            %819 = sbr.rel (0) target = $region52
          $region51: #{_mdn_forward_impl.2} parent=47 // pred_region
            // Predicated region
            $region53: #{_mdn_forward_impl.2} parent=51 // pred_check
              _
            $region54: #{_mdn_forward_impl.2} parent=51 // pred_check_branch
              %821 = sbr.rel (0) target = $region56
            $region55: #{_mdn_forward_impl.2} parent=51 // pred_region
              loop: start=0, step=1, limit=1
              $region57: #{_mdn_forward_impl.2} parent=55 // loop_pre_header
                _
              $region58: #{_mdn_forward_impl.2} parent=55 // loop_header
                %s823 = sphi 0, %s827
                %p824 = scmp.ge.s32.totalorder %s823, 1
                %s828 = sphi %s811, %s811
                %s829 = sphi %s817, %s817
              $region59: #{_mdn_forward_impl.2} parent=55 // loop_header_branch
                %826 = sbr.rel (%p824) target = $region63
              $region60: #{_mdn_forward_impl.2} parent=55 // loop_body
                %v830 = vld [vmem:[%s828] sm:$0xff]
                %831 = vst [vmem:[%s829] sm:$0xff] %v830
                %v832 = vld [vmem:[%s828 + $0x8] sm:$0xff]
                %833 = vst [vmem:[%s829 + $0x8] sm:$0xff] %v832
                %v834 = vld [vmem:[%s828 + $0x10] sm:$0xff]
                %835 = vst [vmem:[%s829 + $0x20] sm:$0xff] %v834
                %v836 = vld [vmem:[%s828 + $0x18] sm:$0xff]
                %837 = vst [vmem:[%s829 + $0x28] sm:$0xff] %v836
                %v838 = vld [vmem:[%s828 + $0x20] sm:$0xff]
                %839 = vst [vmem:[%s829 + $0x40] sm:$0xff] %v838
                %v840 = vld [vmem:[%s828 + $0x28] sm:$0xff]
                %841 = vst [vmem:[%s829 + $0x48] sm:$0xff] %v840
              $region61: #{_mdn_forward_impl.2} parent=55 // loop_footer
                %s827 = sadd.s32 1, %s823
              $region62: #{_mdn_forward_impl.2} parent=55 // loop_footer_branch
                %822 = sbr.rel target = $region58
              $region63: #{_mdn_forward_impl.2} parent=55 // loop_exit
                _
            $region56: #{_mdn_forward_impl.2} parent=51 // pred_fallthru
              _
            // Predicated region
            $region64: #{_mdn_forward_impl.2} parent=51 // pred_check
              _
            $region65: #{_mdn_forward_impl.2} parent=51 // pred_check_branch
              %843 = sbr.rel target = $region67
            $region66: #{_mdn_forward_impl.2} parent=51 // pred_region
              _
            $region67: #{_mdn_forward_impl.2} parent=51 // pred_fallthru
              _
          $region52: #{_mdn_forward_impl.2} parent=47 // pred_fallthru
            _
          %844 = vnop
        $region48: #{_mdn_forward_impl.2} parent=43 // pred_fallthru
          _
      $region44: #{_mdn_forward_impl.2} parent=5 // pred_fallthru
        _
      %p845 = scmp.le.s32.totalorder 2, %s20
      // Predicated region
      $region68: #{_mdn_forward_impl.2} parent=5 // pred_check
        %p846 = pneg %p845
      $region69: #{_mdn_forward_impl.2} parent=5 // pred_check_branch
        %848 = sbr.rel (%p846) target = $region71
      $region70: #{_mdn_forward_impl.2} parent=5 // pred_region
        %s849 = ssub.s32 %s20, 2
        // Predicated region
        $region72: #{_mdn_forward_impl.2} parent=70 // pred_check
          %p850 = pneg %p180
        $region73: #{_mdn_forward_impl.2} parent=70 // pred_check_branch
          %852 = sbr.rel (%p850) target = $region75
        $region74: #{_mdn_forward_impl.2} parent=70 // pred_region
          %s853 = sand.u32 %s165, 1
          %s854 = sand.u32 %s165, 1
          %s855 = smul.addr %s854, 48
          %s856 = scalar_lea.vmem [#allocation7], %s855
        $region75: #{_mdn_forward_impl.2} parent=70 // pred_fallthru
          _
      $region71: #{_mdn_forward_impl.2} parent=5 // pred_fallthru
        _
    $region6: #{_mdn_forward_impl.2} parent=1 // loop_footer
      %s24 = sadd.s32 1, %s20
    $region7: #{_mdn_forward_impl.2} parent=1 // loop_footer_branch
      %19 = sbr.rel target = $region3
    $region8: #{_mdn_forward_impl.2} parent=1 // loop_exit
      _

</llo_original>
